<compile_context>
chip_gen: v7x
topology: tpu7x:2x2x1
jax: 0.10.0
libtpu: 0.0.40
codegen_flags: <defaults>
</compile_context>

<pallas_src>
import jax
import jax.numpy as jnp
import numpy as np
from jax.experimental import pallas as pl
from jax.experimental.pallas import tpu as pltpu


def _vmem_block_budget_bytes():
    """VMEM budget used for picking the batch block (not the scoped limit)."""
    cap = None
    try:
        cap = getattr(pltpu.get_tpu_info(), "vmem_capacity_bytes", None)
    except Exception:
        cap = None
    if not cap:
        cap = 64 << 20          # conservative default: v7x per-TensorCore VMEM
    # Leave generous headroom for compiler scratch / pipelining on every gen.
    return min(cap * 3 // 8, 24 << 20)


def directed_graph_convolution(inputs, adj, weight1, weight2, *,
                               batch_block=None):
    """Pallas forward pass of DirectedGraphConvolution (dropout in eval mode)."""
    B, N, Fin = inputs.shape
    Fout = weight1.shape[1]
    assert adj.shape == (B, N, N)
    assert weight1.shape == (Fin, Fout) and weight2.shape == (Fin, Fout)

    # Lane-dense outputs: pad Fout up to a multiple of 128 lanes. The two
    # weight matrices are concatenated (each zero-padded) so a single MXU call
    # produces [x@W1 | x@W2]; padded columns are sliced off after the kernel.
    Fp = ((Fout + 127) // 128) * 128
    pad = Fp - Fout
    w_cat = jnp.concatenate(
        [jnp.pad(weight1, ((0, 0), (0, pad))),
         jnp.pad(weight2, ((0, 0), (0, pad)))], axis=1).astype(inputs.dtype)

    x_item = inputs.dtype.itemsize
    adj_item = adj.dtype.itemsize
    w_item = w_cat.dtype.itemsize
    out_item = x_item

    # Accurate per-grid-step VMEM accounting: Pallas double-buffers every
    # auto-pipelined input/output block; add the xw scratch and the f32
    # temporaries of one in-flight batch element.
    def _block_bytes(bt):
        b = 2 * bt * N * Fin * x_item        # x block  (double-buffered)
        b += 2 * bt * N * N * adj_item       # adj block
        b += 2 * bt * N * Fp * out_item      # out block
        b += 2 * Fin * 2 * Fp * w_item       # w_cat block
        b += bt * N * 2 * Fp * x_item        # xw scratch (single buffer)
        b += 4 * N * Fp * 4                  # y1, y2, out1, out2 (f32)
        b += 2 * N * Fp * x_item             # xw1 / xw2 views
        b += N * N * adj_item                # adj_b value
        return b

    if batch_block is None:
        budget = _vmem_block_budget_bytes()
        batch_block = 1
        # Cap at B//2 so dimension_semantics=("parallel",) always has >= 2
        # grid steps to shard across v7x's two TensorCores.
        for bt in range(1, max(1, B // 2) + 1):
            if B % bt == 0 and _block_bytes(bt) <= budget:
                batch_block = bt
    assert B % batch_block == 0, "batch_block must divide the batch size"
    Bt = batch_block

    # Folding (Bt, N) into the sublane dim needs N aligned to the sublane
    # packing of the dtype (8 for f32, 16 for bf16, 32 for int8).
    packing = max(1, 4 // x_item)
    sublane = 8 * packing
    fuse_batch = (Bt > 1) and (N % sublane == 0)
    # Fold rowsum/colsum into the adjacency matmuls via a ones pad column.
    fuse_sums = pad >= 1

    def kernel(x_ref, adj_ref, wcat_ref, o_ref, *scratch):
        xw_ref = scratch[0] if scratch else None

        def set_ones_cols(xw):
            # Overwrite the first pad column of each half with 1.0 so the
            # adjacency matmuls also emit rowsum / colsum (sliced off later).
            if not fuse_sums:
                return xw
            lane = jax.lax.broadcasted_iota(jnp.int32, xw.shape, xw.ndim - 1)
            mark = (lane == Fout) | (lane == Fp + Fout)
            return jnp.where(mark, jnp.ones_like(xw), xw)

        def compute_one(bi, xw_b):
            adj_b = adj_ref[bi]                                   # (N, N)
            xw1 = xw_b[:, :Fp]
            xw2 = xw_b[:, Fp:]

            # y1 = adj @ (x W1);  y2 = adj^T @ (x W2) (no materialized adj.T).
            y1 = jnp.dot(adj_b, xw1, preferred_element_type=jnp.float32)
            y2 = jax.lax.dot_general(adj_b, xw2, (((0,), (0,)), ((), ())),
                                     preferred_element_type=jnp.float32)

            if fuse_sums:
                # Column Fout of each product carries the row / column sums.
                rowsum = y1[:, Fout:Fout + 1]
                colsum = y2[:, Fout:Fout + 1]
            else:
                rowsum = jnp.sum(adj_b, axis=1,
                                 keepdims=True).astype(jnp.float32)
                ones_col = jnp.ones((N, 1), dtype=adj_b.dtype)
                colsum = jax.lax.dot_general(adj_b, ones_col,
                                             (((0,), (0,)), ((), ())),
                                             preferred_element_type=jnp.float32)

            # Fold the final 0.5 averaging into the scales (exact: *0.5 is a
            # power of two and commutes with relu for positive sums).
            # NOTE: zero row/col sums (isolated nodes) give inf/NaN exactly
            # like the PyTorch reference; negative sums would change relu
            # behaviour relative to the reference (not expected for adjacency).
            scale1 = pl.reciprocal(rowsum, approx=False) * 0.5
            scale2 = pl.reciprocal(colsum, approx=False) * 0.5

            out = jnp.maximum(y1 * scale1, 0.0) + jnp.maximum(y2 * scale2, 0.0)
            o_ref[bi] = out.astype(o_ref.dtype)

        if fuse_batch:
            # One fused feature matmul for the whole batch block, staged in
            # VMEM scratch to bound its live range across the per-bi loop.
            x2d = x_ref[...].reshape(Bt * N, Fin)
            xw_all = jnp.dot(x2d, wcat_ref[...],
                             preferred_element_type=jnp.float32)
            xw_ref[...] = set_ones_cols(xw_all.astype(xw_ref.dtype))

            if Bt <= 4:
                for bi in range(Bt):
                    compute_one(bi, xw_ref[pl.ds(bi * N, N), :])
            else:
                @pl.loop(0, Bt)
                def _(bi):
                    start = pl.multiple_of(bi * N, sublane)
                    compute_one(bi, xw_ref[pl.ds(start, N), :])
        else:
            def per_bi(bi):
                xw_b = set_ones_cols(
                    jnp.dot(x_ref[bi], wcat_ref[...],
                            preferred_element_type=jnp.float32
                            ).astype(x_ref.dtype))
                compute_one(bi, xw_b)

            if Bt <= 4:
                for bi in range(Bt):
                    per_bi(bi)
            else:
                @pl.loop(0, Bt)
                def _(bi):
                    per_bi(bi)

    scratch_shapes = []
    if fuse_batch:
        scratch_shapes.append(pltpu.VMEM((Bt * N, 2 * Fp), inputs.dtype))

    grid_spec = pltpu.PrefetchScalarGridSpec(
        num_scalar_prefetch=0,
        grid=(B // Bt,),
        in_specs=[
            pl.BlockSpec((Bt, N, Fin), lambda b: (b, 0, 0)),
            pl.BlockSpec((Bt, N, N), lambda b: (b, 0, 0)),
            pl.BlockSpec((Fin, 2 * Fp), lambda b: (0, 0)),
        ],
        out_specs=pl.BlockSpec((Bt, N, Fp), lambda b: (b, 0, 0)),
        scratch_shapes=scratch_shapes,
    )

    required_vmem = _block_bytes(Bt)
    vmem_limit = int(min(max(required_vmem + (8 << 20), 32 << 20), 64 << 20))

    cost = pl.CostEstimate(
        flops=2 * B * N * Fin * 2 * Fp + 2 * B * N * N * 2 * Fp,
        transcendentals=0,
        bytes_accessed=(B * N * Fin * x_item + B * N * N * adj_item
                        + Fin * 2 * Fp * w_item + B * N * Fp * out_item),
    )

    out_padded = pl.pallas_call(
        kernel,
        out_shape=jax.ShapeDtypeStruct((B, N, Fp), inputs.dtype),
        grid_spec=grid_spec,
        compiler_params=pltpu.CompilerParams(
            dimension_semantics=("parallel",),
            vmem_limit_bytes=vmem_limit),
        cost_estimate=cost,
    )(inputs, adj, w_cat)

    if pad == 0:
        return out_padded
    return out_padded[..., :Fout]


def _xavier_uniform(key, fan_in, fan_out, dtype=jnp.float32):
    bound = float(np.sqrt(6.0 / (fan_in + fan_out)))
    return jax.random.uniform(key, (fan_in, fan_out), dtype=dtype,
                              minval=-bound, maxval=bound)


def _reference(inputs, adj, w1, w2):
    # Pure-JAX reference mirroring the PyTorch forward (eval mode).
    def norm(a):
        return a / jnp.sum(a, axis=2, keepdims=True)
    norm_adj = norm(adj)
    inv_norm_adj = norm(jnp.swapaxes(adj, 1, 2))
    out1 = jax.nn.relu(jnp.einsum('bij,bjf->bif', norm_adj,
                                  jnp.einsum('bnf,fo->bno', inputs, w1)))
    out2 = jax.nn.relu(jnp.einsum('bij,bjf->bif', inv_norm_adj,
                                  jnp.einsum('bnf,fo->bno', inputs, w2)))
    return (out1 + out2) / 2.0


if __name__ == "__main__":
    key = jax.random.PRNGKey(0)

    # Small configs exercising the three code paths:
    #   (16, 8, 32, 32): Bt=8 -> fused feature matmul + scratch + pl.loop
    #   ( 8, 8, 16, 32): Bt=4 -> fused feature matmul + static unrolled loop
    #   ( 2,12, 16,128): Bt=1, N not sublane-aligned, pad==0 -> fallback sums
    configs = [(16, 8, 32, 32), (8, 8, 16, 32), (2, 12, 16, 128)]

    for ci, (B, N, in_features, out_features) in enumerate(configs):
        k_x, k_adj, k_w1, k_w2 = jax.random.split(jax.random.fold_in(key, ci), 4)

        inputs = jax.random.normal(k_x, (B, N, in_features), dtype=jnp.float32)
        # Positive adjacency so every row/column sum is nonzero.
        adj = jax.random.uniform(k_adj, (B, N, N), dtype=jnp.float32,
                                 minval=0.1, maxval=1.0)
        weight1 = _xavier_uniform(k_w1, in_features, out_features)
        weight2 = _xavier_uniform(k_w2, in_features, out_features)

        out = directed_graph_convolution(inputs, adj, weight1, weight2)
        out = jax.block_until_ready(out)

        ref = _reference(inputs, adj, weight1, weight2)
        # Kernel normalizes after the matmul (mathematically identical,
        # different f32 rounding order).
        np.testing.assert_allclose(np.asarray(out), np.asarray(ref),
                                   rtol=2e-5, atol=2e-5)

    print("KERNEL_OK")
</pallas_src>

<mosaic_0001>
module attributes {stable_mosaic.version = 11 : i64} {
  func.func @kernel(%arg0: i32, %arg1: memref<8x8x32xf32, #tpu.memory_space<vmem>>, %arg2: memref<8x8x8xf32, #tpu.memory_space<vmem>>, %arg3: memref<32x256xf32, #tpu.memory_space<vmem>>, %arg4: memref<8x8x128xf32, #tpu.memory_space<vmem>>, %arg5: memref<64x256xf32, #tpu.memory_space<vmem>>) attributes {dimension_semantics = [#tpu.dimension_semantics<parallel>], iteration_bounds = array<i64: 2>, scalar_prefetch = 0 : i64, scratch_operands = 1 : i64, tpu.core_type = #tpu.core_type<tc>, window_params = [{transform_indices = @transform_0, window_bounds = array<i64: 8, 8, 32>}, {transform_indices = @transform_1, window_bounds = array<i64: 8, 8, 8>}, {pipeline_mode = #tpu.pipeline_mode<synchronous>, transform_indices = @transform_2, window_bounds = array<i64: 32, 256>}, {transform_indices = @transform_3, window_bounds = array<i64: 8, 8, 128>}]} {
    %c0 = arith.constant 0 : index
    %c0_0 = arith.constant 0 : index
    %c0_1 = arith.constant 0 : index
    %0 = vector.load %arg1[%c0, %c0_0, %c0_1] : memref<8x8x32xf32, #tpu.memory_space<vmem>>, vector<8x8x32xf32>
    %1 = vector.shape_cast %0 : vector<8x8x32xf32> to vector<64x32xf32>
    %c0_2 = arith.constant 0 : index
    %c0_3 = arith.constant 0 : index
    %2 = vector.load %arg3[%c0_2, %c0_3] : memref<32x256xf32, #tpu.memory_space<vmem>>, vector<32x256xf32>
    %cst = arith.constant dense<0.000000e+00> : vector<64x256xf32>
    %3 = tpu.matmul %1, %2, %cst {dimension_numbers = #tpu.dot_dimension_numbers<[1], [0], [0], [1], [0, 0, 1, 1], [], []>} : vector<64x32xf32>, vector<32x256xf32>, vector<64x256xf32> -> vector<64x256xf32>
    %4 = tpu.iota {dimensions = array<i32: 1>} : vector<64x256xi32>
    %c32_i32 = arith.constant 32 : i32
    %5 = vector.broadcast %c32_i32 : i32 to vector<64x256xi32>
    %6 = arith.cmpi eq, %4, %5 : vector<64x256xi32>
    %c160_i32 = arith.constant 160 : i32
    %7 = vector.broadcast %c160_i32 : i32 to vector<64x256xi32>
    %8 = arith.cmpi eq, %4, %7 : vector<64x256xi32>
    %9 = arith.ori %6, %8 : vector<64x256xi1>
    %cst_4 = arith.constant 1.000000e+00 : f32
    %10 = vector.broadcast %cst_4 : f32 to vector<64x256xf32>
    %11 = arith.select %9, %10, %3 : vector<64x256xi1>, vector<64x256xf32>
    %c0_5 = arith.constant 0 : index
    %c0_6 = arith.constant 0 : index
    %12 = vector.load %arg5[%c0_5, %c0_6] : memref<64x256xf32, #tpu.memory_space<vmem>>, vector<64x256xf32>
    tpu.vector_store %arg5[%c0_5, %c0_6], %11 {strides = array<i32>} : memref<64x256xf32, #tpu.memory_space<vmem>>, vector<64x256xf32>,
    %c0_i32 = arith.constant 0 : i32
    %c8_i32 = arith.constant 8 : i32
    %13 = arith.addi %c0_i32, %c8_i32 : i32
    %c1_i32 = arith.constant 1 : i32
    scf.for %arg6 = %c0_i32 to %13 step %c1_i32  : i32 {
      %c1_i32_8 = arith.constant 1 : i32
      %14 = arith.muli %arg6, %c1_i32_8 : i32
      %c0_i32_9 = arith.constant 0 : i32
      %15 = arith.addi %c0_i32_9, %14 : i32
      %c8_i32_10 = arith.constant 8 : i32
      %16 = arith.muli %15, %c8_i32_10 : i32
      %17 = tpu.assume_multiple %16, 8 : i32
      %18 = arith.index_cast %17 : i32 to index
      %c0_11 = arith.constant 0 : index
      %19 = vector.load %arg5[%18, %c0_11] : memref<64x256xf32, #tpu.memory_space<vmem>>, vector<8x256xf32>
      %20 = arith.index_cast %15 : i32 to index
      %c0_12 = arith.constant 0 : index
      %c0_13 = arith.constant 0 : index
      %21 = vector.load %arg2[%20, %c0_12, %c0_13] : memref<8x8x8xf32, #tpu.memory_space<vmem>>, vector<1x8x8xf32>
      %22 = vector.shape_cast %21 : vector<1x8x8xf32> to vector<8x8xf32>
      %23 = vector.extract_strided_slice %19 {offsets = [0, 0], sizes = [8, 128], strides = [1, 1]} : vector<8x256xf32> to vector<8x128xf32>
      %24 = vector.extract_strided_slice %19 {offsets = [0, 128], sizes = [8, 128], strides = [1, 1]} : vector<8x256xf32> to vector<8x128xf32>
      %cst_14 = arith.constant dense<0.000000e+00> : vector<8x128xf32>
      %25 = tpu.matmul %22, %23, %cst_14 {dimension_numbers = #tpu.dot_dimension_numbers<[1], [0], [0], [1], [0, 0, 1, 1], [], []>} : vector<8x8xf32>, vector<8x128xf32>, vector<8x128xf32> -> vector<8x128xf32>
      %cst_15 = arith.constant dense<0.000000e+00> : vector<8x128xf32>
      %26 = tpu.matmul %22, %24, %cst_15 {dimension_numbers = #tpu.dot_dimension_numbers<[0], [0], [1], [1], [0, 1, 1, 1], [], []>} : vector<8x8xf32>, vector<8x128xf32>, vector<8x128xf32> -> vector<8x128xf32>
      %27 = vector.extract_strided_slice %25 {offsets = [0, 32], sizes = [8, 1], strides = [1, 1]} : vector<8x128xf32> to vector<8x1xf32>
      %28 = vector.extract_strided_slice %26 {offsets = [0, 32], sizes = [8, 1], strides = [1, 1]} : vector<8x128xf32> to vector<8x1xf32>
      %29 = tpu.reciprocal %27 : vector<8x1xf32> -> vector<8x1xf32>
      %cst_16 = arith.constant 5.000000e-01 : f32
      %30 = vector.broadcast %cst_16 : f32 to vector<8x1xf32>
      %31 = arith.mulf %29, %30 : vector<8x1xf32>
      %32 = tpu.reciprocal %28 : vector<8x1xf32> -> vector<8x1xf32>
      %cst_17 = arith.constant 5.000000e-01 : f32
      %33 = vector.broadcast %cst_17 : f32 to vector<8x1xf32>
      %34 = arith.mulf %32, %33 : vector<8x1xf32>
      %35 = vector.broadcast %31 : vector<8x1xf32> to vector<8x128xf32>
      %36 = arith.mulf %25, %35 : vector<8x128xf32>
      %cst_18 = arith.constant 0.000000e+00 : f32
      %37 = vector.broadcast %cst_18 : f32 to vector<8x128xf32>
      %38 = arith.maximumf %36, %37 : vector<8x128xf32>
      %39 = vector.broadcast %34 : vector<8x1xf32> to vector<8x128xf32>
      %40 = arith.mulf %26, %39 : vector<8x128xf32>
      %cst_19 = arith.constant 0.000000e+00 : f32
      %41 = vector.broadcast %cst_19 : f32 to vector<8x128xf32>
      %42 = arith.maximumf %40, %41 : vector<8x128xf32>
      %43 = arith.addf %38, %42 : vector<8x128xf32>
      %44 = arith.index_cast %15 : i32 to index
      %c0_20 = arith.constant 0 : index
      %c0_21 = arith.constant 0 : index
      %45 = vector.load %arg4[%44, %c0_20, %c0_21] : memref<8x8x128xf32, #tpu.memory_space<vmem>>, vector<1x8x128xf32>
      %46 = vector.shape_cast %45 : vector<1x8x128xf32> to vector<8x128xf32>
      %47 = vector.shape_cast %43 : vector<8x128xf32> to vector<1x8x128xf32>
      tpu.vector_store %arg4[%44, %c0_20, %c0_21], %47 {strides = array<i32>} : memref<8x8x128xf32, #tpu.memory_space<vmem>>, vector<1x8x128xf32>,
    }
    %c8_i32_7 = arith.constant 8 : i32
    return
  }
  func.func @transform_0(%arg0: i32) -> (i32, i32, i32) {
    %c0_i32 = arith.constant 0 : i32
    %c0_i32_0 = arith.constant 0 : i32
    %c0_i32_1 = arith.constant 0 : i32
    return %arg0, %c0_i32, %c0_i32_0 : i32, i32, i32
  }
  func.func @transform_1(%arg0: i32) -> (i32, i32, i32) {
    %c0_i32 = arith.constant 0 : i32
    %c0_i32_0 = arith.constant 0 : i32
    %c0_i32_1 = arith.constant 0 : i32
    return %arg0, %c0_i32, %c0_i32_0 : i32, i32, i32
  }
  func.func @transform_2(%arg0: i32) -> (i32, i32) {
    %c0_i32 = arith.constant 0 : i32
    %c0_i32_0 = arith.constant 0 : i32
    %c0_i32_1 = arith.constant 0 : i32
    return %c0_i32, %c0_i32_0 : i32, i32
  }
  func.func @transform_3(%arg0: i32) -> (i32, i32, i32) {
    %c0_i32 = arith.constant 0 : i32
    %c0_i32_0 = arith.constant 0 : i32
    %c0_i32_1 = arith.constant 0 : i32
    return %arg0, %c0_i32, %c0_i32_0 : i32, i32, i32
  }
}

</mosaic_0001>

<llo_original>
// kernel: tpu_custom_call.1
$region0: #{tpu_custom_call.1}
  #allocation0 [shape = 'u32[]', space=smem, size = 0x4, offset = 0x4, fixed_abs, tag = 'smem constant byte address 0x4 - core index']
  #allocation1 [shape = 'u32[144,128]{1,0:T(1,128)}', space=vmem, size = 0x12000, scoped, tag = 'internal scratch']
  #allocation2 [shape = 'f32[64,256]{1,0:T(8,128)}', space=vmem, size = 0x10000, scoped, tag = 'scratch operand']
  %s0 = inlined_call_operand.vmem [shape: f32[16,8,32], index: 0, kind: input, shape index: {}]
  %s1 = inlined_call_operand.vmem [shape: f32[16,8,8], index: 1, kind: input, shape index: {}]
  %s2 = inlined_call_operand.vmem [shape: f32[32,256], index: 2, kind: input, shape index: {}]
  %s3 = inlined_call_operand.hbm [shape: f32[16,8,128], index: 3, kind: output, shape index: {}]
  %s4 = sld [smem:[#allocation0]]
  $region52: #{tpu_custom_call.1} parent=0
    _
  %s6 = ssub.s32 1, %s4
  %s7 = scalar_select 0, %s6, %s4
  $region1: #{tpu_custom_call.1} parent=0
    #allocation3 [shape = 'u8[65536]{0}', space=vmem, size = 0x10000, scoped, tag = 'output window, operand 0']
    #allocation4 [shape = 's32[2]{0}', space=sflag, size = 0x8, scoped, tag = 'scoped memory for tpu_custom_call.1']
    %8 = vsyncpa [#allocation4], 0
    %s9 = scalar_lea.sflag [#allocation4], 1
    %10 = vsyncpa %s9, 0
    loop: start=0, step=1, limit=4
    $region2: #{tpu_custom_call.1} parent=1 // loop_pre_header
      _
    $region3: #{tpu_custom_call.1} parent=1 // loop_header
      %s12 = sphi 0, %s16
      %p13 = scmp.ge.s32.totalorder %s12, 4
      %s22 = sphi 0, %s24
      %s25 = sphi 0, %s22
      %s26 = sphi 0, %s25
      %s42 = sphi 0, %s26
      %s48 = sphi 0, %s50
      %s51 = sphi 0, %s48
      %s52 = sphi 0, %s51
      %s68 = sphi 0, %s52
      %s72 = sphi 0, %s72
      %s74 = sphi 0, %s72
      %s75 = sphi 0, %s74
      %s89 = sphi 0, %s75
      %s95 = sphi 0, %s97
      %s98 = sphi 0, %s95
      %s99 = sphi 0, %s98
      %s115 = sphi 0, %s99
    $region4: #{tpu_custom_call.1} parent=1 // loop_header_branch
      %15 = sbr.rel (%p13) target = $region8
    $region5: #{tpu_custom_call.1} parent=1 // loop_body
      %s17 = ssub.s32 %s12, 1
      %s18 = ssub.s32 %s12, 2
      %s19 = sadd.s32 %s12, 1
      %s20 = ssub.s32 %s12, %s19
      %p21 = scmp.eq.s32.totalorder %s20, 0
      %s23 = sadd.s32 %s22, 1
      %s24 = scalar_select %p21, %s22, %s23
      %p27 = pneg %p21
      %p28 = scmp.eq.s32.totalorder %s12, 1
      %p29 = por %p27, %p28
      %p30 = scmp.ne.s32.totalorder %s22, %s25
      %p31 = scmp.eq.s32.totalorder %s12, 0
      %p32 = por %p30, %p31
      %p33 = scmp.ne.s32.totalorder %s22, %s25
      %p34 = scmp.eq.s32.totalorder %s17, 1
      %p35 = por %p33, %p34
      %p36 = scmp.ne.s32.totalorder %s25, %s26
      %p37 = scmp.eq.s32.totalorder %s17, 0
      %p38 = por %p36, %p37
      %p39 = scmp.ne.s32.totalorder %s25, %s26
      %p40 = scmp.eq.s32.totalorder %s18, 1
      %p41 = por %p39, %p40
      %p43 = scmp.ne.s32.totalorder %s26, %s42
      %p44 = scmp.eq.s32.totalorder %s18, 0
      %p45 = por %p43, %p44
      %s46 = ssub.s32 %s12, %s19
      %p47 = scmp.eq.s32.totalorder %s46, 0
      %s49 = sadd.s32 %s48, 1
      %s50 = scalar_select %p47, %s48, %s49
      %p53 = pneg %p47
      %p54 = scmp.eq.s32.totalorder %s12, 1
      %p55 = por %p53, %p54
      %p56 = scmp.ne.s32.totalorder %s48, %s51
      %p57 = scmp.eq.s32.totalorder %s12, 0
      %p58 = por %p56, %p57
      %p59 = scmp.ne.s32.totalorder %s48, %s51
      %p60 = scmp.eq.s32.totalorder %s17, 1
      %p61 = por %p59, %p60
      %p62 = scmp.ne.s32.totalorder %s51, %s52
      %p63 = scmp.eq.s32.totalorder %s17, 0
      %p64 = por %p62, %p63
      %p65 = scmp.ne.s32.totalorder %s51, %s52
      %p66 = scmp.eq.s32.totalorder %s18, 1
      %p67 = por %p65, %p66
      %p69 = scmp.ne.s32.totalorder %s52, %s68
      %p70 = scmp.eq.s32.totalorder %s18, 0
      %p71 = por %p69, %p70
      %s73 = sadd.s32 %s72, 1
      %p76 = scmp.eq.s32.totalorder %s12, 1
      %p77 = scmp.ne.s32.totalorder %s72, %s74
      %p78 = scmp.eq.s32.totalorder %s12, 0
      %p79 = por %p77, %p78
      %p80 = scmp.ne.s32.totalorder %s72, %s74
      %p81 = scmp.eq.s32.totalorder %s17, 1
      %p82 = por %p80, %p81
      %p83 = scmp.ne.s32.totalorder %s74, %s75
      %p84 = scmp.eq.s32.totalorder %s17, 0
      %p85 = por %p83, %p84
      %p86 = scmp.ne.s32.totalorder %s74, %s75
      %p87 = scmp.eq.s32.totalorder %s18, 1
      %p88 = por %p86, %p87
      %p90 = scmp.ne.s32.totalorder %s75, %s89
      %p91 = scmp.eq.s32.totalorder %s18, 0
      %p92 = por %p90, %p91
      %s93 = ssub.s32 %s12, %s19
      %p94 = scmp.eq.s32.totalorder %s93, 0
      %s96 = sadd.s32 %s95, 1
      %s97 = scalar_select %p94, %s95, %s96
      %p100 = pneg %p94
      %p101 = scmp.eq.s32.totalorder %s12, 1
      %p102 = por %p100, %p101
      %p103 = scmp.ne.s32.totalorder %s95, %s98
      %p104 = scmp.eq.s32.totalorder %s12, 0
      %p105 = por %p103, %p104
      %p106 = scmp.ne.s32.totalorder %s95, %s98
      %p107 = scmp.eq.s32.totalorder %s17, 1
      %p108 = por %p106, %p107
      %p109 = scmp.ne.s32.totalorder %s98, %s99
      %p110 = scmp.eq.s32.totalorder %s17, 0
      %p111 = por %p109, %p110
      %p112 = scmp.ne.s32.totalorder %s98, %s99
      %p113 = scmp.eq.s32.totalorder %s18, 1
      %p114 = por %p112, %p113
      %p116 = scmp.ne.s32.totalorder %s99, %s115
      %p117 = scmp.eq.s32.totalorder %s18, 0
      %p118 = por %p116, %p117
      %p119 = scmp.le.s32.totalorder 1, %s12
      %p120 = scmp.lt.s32.totalorder %s12, 3
      %p121 = pnand %p119, %p120
      %p122 = pneg %p121
      // Predicated region
      $region9: #{tpu_custom_call.1} parent=5 // pred_check
        _
      $region10: #{tpu_custom_call.1} parent=5 // pred_check_branch
        %124 = sbr.rel (%p121) target = $region12
      $region11: #{tpu_custom_call.1} parent=5 // pred_region
        %s125 = ssub.s32 %s12, 1
        // Predicated region
        $region13: #{tpu_custom_call.1} parent=11 // pred_check
          %p126 = pneg %p85
        $region14: #{tpu_custom_call.1} parent=11 // pred_check_branch
          %128 = sbr.rel (%p126) target = $region16
        $region15: #{tpu_custom_call.1} parent=11 // pred_region
          _
        $region16: #{tpu_custom_call.1} parent=11 // pred_fallthru
          _
      $region12: #{tpu_custom_call.1} parent=5 // pred_fallthru
        _
      %p129 = scmp.lt.s32.totalorder %s12, 2
      // Predicated region
      $region17: #{tpu_custom_call.1} parent=5 // pred_check
        %p130 = pneg %p129
      $region18: #{tpu_custom_call.1} parent=5 // pred_check_branch
        %132 = sbr.rel (%p130) target = $region20
      $region19: #{tpu_custom_call.1} parent=5 // pred_region
        // Predicated region
        $region21: #{tpu_custom_call.1} parent=19 // pred_check
          %p133 = pneg %p32
        $region22: #{tpu_custom_call.1} parent=19 // pred_check_branch
          %135 = sbr.rel (%p133) target = $region24
        $region23: #{tpu_custom_call.1} parent=19 // pred_region
          %s136 = smul.u32 8, %s12
          %p137 = scmp.lt.s32.totalorder %s136, 15
          %s138 = scalar_select %p137, %s136, 15
          %s139 = smul.addr %s138, 8
          %s140 = scalar_lea.vmem %s0, %s139
          %s141 = smul.u32 8, %s12
        $region24: #{tpu_custom_call.1} parent=19 // pred_fallthru
          _
        // Predicated region
        $region25: #{tpu_custom_call.1} parent=19 // pred_check
          %p142 = pneg %p58
        $region26: #{tpu_custom_call.1} parent=19 // pred_check_branch
          %144 = sbr.rel (%p142) target = $region28
        $region27: #{tpu_custom_call.1} parent=19 // pred_region
          %s145 = smul.u32 8, %s12
          %p146 = scmp.lt.s32.totalorder %s145, 15
          %s147 = scalar_select %p146, %s145, 15
          %s148 = smul.addr %s147, 8
          %s149 = scalar_lea.vmem %s1, %s148
          %s150 = smul.u32 8, %s12
        $region28: #{tpu_custom_call.1} parent=19 // pred_fallthru
          _
      $region20: #{tpu_custom_call.1} parent=5 // pred_fallthru
        _
      %p151 = scmp.le.s32.totalorder 1, %s12
      %p152 = scmp.lt.s32.totalorder %s12, 3
      %p153 = pnand %p151, %p152
      %p154 = pneg %p153
      // Predicated region
      $region29: #{tpu_custom_call.1} parent=5 // pred_check
        _
      $region30: #{tpu_custom_call.1} parent=5 // pred_check_branch
        %156 = sbr.rel (%p153) target = $region32
      $region31: #{tpu_custom_call.1} parent=5 // pred_region
        %s157 = ssub.s32 %s12, 1
        %s158 = smul.u32 8, %s17
        %p159 = scmp.lt.s32.totalorder %s158, 15
        %s160 = scalar_select %p159, %s158, 15
        %s161 = smul.addr %s160, 8
        %s162 = scalar_lea.vmem %s0, %s161
        %p163 = pneg %p38
        %p164 = pneg %p35
        %s165 = smul.u32 8, %s17
        %p166 = scmp.lt.s32.totalorder %s165, 15
        %s167 = scalar_select %p166, %s165, 15
        %s168 = smul.addr %s167, 8
        %s169 = scalar_lea.vmem %s1, %s168
        %p170 = pneg %p64
        %p171 = pneg %p61
        %p172 = pneg %p85
        %p173 = pneg %p82
        %p174 = pneg %p111
        %p175 = pneg %p108
        %s176 = sand.u32 %s98, 1
        %s177 = scalar_lea.sflag [#allocation4], %s176
        %s178 = sand.u32 %s98, 1
        %s179 = smul.addr %s178, 64
        %s180 = scalar_lea.vmem [#allocation3], %s179
        %s181 = smul.u32 8, %s17
        %p182 = scmp.lt.s32.totalorder %s181, 15
        %s183 = scalar_select %p182, %s181, 15
        %s184 = smul.addr %s183, 8
        %s185 = scalar_lea.vmem %s0, %s184
        %s186 = smul.u32 8, %s17
        %s187 = smul.u32 8, %s17
        %p188 = scmp.lt.s32.totalorder %s187, 15
        %s189 = scalar_select %p188, %s187, 15
        %s190 = smul.addr %s189, 8
        %s191 = scalar_lea.vmem %s1, %s190
        %s192 = smul.u32 8, %s17
        %s193 = smul.u32 8, %s17
        %v194 = vld [vmem:[%s185] sm:$0xff]
        %v195 = vld [vmem:[%s185 + $0x8] sm:$0xff]
        %v196 = vld [vmem:[%s185 + $0x10] sm:$0xff]
        %v197 = vld [vmem:[%s185 + $0x18] sm:$0xff]
        %v198 = vld [vmem:[%s185 + $0x20] sm:$0xff]
        %v199 = vld [vmem:[%s185 + $0x28] sm:$0xff]
        %v200 = vld [vmem:[%s185 + $0x30] sm:$0xff]
        %v201 = vld [vmem:[%s185 + $0x38] sm:$0xff]
        %v202 = vld [vmem:[%s2] sm:$0xff]
        %v203 = vld [vmem:[%s2 + $0x8] sm:$0xff]
        %v204 = vld [vmem:[%s2 + $0x10] sm:$0xff]
        %v205 = vld [vmem:[%s2 + $0x18] sm:$0xff]
        %v206 = vld [vmem:[%s2 + $0x20] sm:$0xff]
        %v207 = vld [vmem:[%s2 + $0x28] sm:$0xff]
        %v208 = vld [vmem:[%s2 + $0x30] sm:$0xff]
        %v209 = vld [vmem:[%s2 + $0x38] sm:$0xff]
        %vm210 = vcmask 261120
        %v212 = vsel %vm210, %v194, 0
        %v215 = vsel %vm210, %v195, 0
        %v218 = vsel %vm210, %v196, 0
        %v221 = vsel %vm210, %v197, 0
        %v224 = vsel %vm210, %v198, 0
        %v227 = vsel %vm210, %v199, 0
        %v230 = vsel %vm210, %v200, 0
        %v233 = vsel %vm210, %v201, 0
        %235 = vmatprep.subr.mxu0 %v203
        %236 = vmatpush1.msra.mxu0 %v202
        %237 = vmatprep.subr.mxu0 %v205
        %238 = vmatpush1.msra.mxu0 %v204
        %239 = vmatprep.subr.mxu0 %v207
        %240 = vmatpush1.msra.mxu0 %v206
        %241 = vmatprep.subr.mxu0 %v209
        %242 = vmatpush1.msra.mxu0 %v208
        %243 = vmatprep.subr.mxu0 0.0
        %244 = vmatpush1.msra.mxu0 0.0
        %245 = vmatprep.subr.mxu0 0.0
        %246 = vmatpush1.msra.mxu0 0.0
        %247 = vmatprep.subr.mxu0 0.0
        %248 = vmatpush1.msra.mxu0 0.0
        %249 = vmatprep.subr.mxu0 0.0
        %250 = vmatpush1.msra.mxu0 0.0
        %251 = vmatprep.subr.mxu0 0.0
        %252 = vmatpush1.msra.mxu0 0.0
        %253 = vmatprep.subr.mxu0 0.0
        %254 = vmatpush1.msra.mxu0 0.0
        %255 = vmatprep.subr.mxu0 0.0
        %256 = vmatpush1.msra.mxu0 0.0
        %257 = vmatprep.subr.mxu0 0.0
        %258 = vmatpush1.msra.mxu0 0.0
        %259 = vmatprep.subr.mxu0 0.0
        %260 = vmatpush1.msra.mxu0 0.0
        %261 = vmatprep.subr.mxu0 0.0
        %262 = vmatpush1.msra.mxu0 0.0
        %263 = vmatprep.subr.mxu0 0.0
        %264 = vmatpush1.msra.mxu0 0.0
        %265 = vmatprep.subr.mxu0 0.0
        %266 = vmatpush1.msra.mxu0 0.0
        %267 = vmatprep.subr.mxu0 0.0
        %268 = vmatpush1.msra.mxu0 0.0
        %269 = vmatprep.subr.mxu0 0.0
        %270 = vmatpush1.msra.mxu0 0.0
        %271 = vmatprep.subr.mxu0 0.0
        %272 = vmatpush1.msra.mxu0 0.0
        %273 = vmatprep.subr.mxu0 0.0
        %274 = vmatpush1.msra.mxu0 0.0
        %275 = vmatprep.subr.mxu0 0.0
        %276 = vmatpush1.msra.mxu0 0.0
        %277 = vmatprep.subr.mxu0 0.0
        %278 = vmatpush1.msra.mxu0 0.0
        %279 = vmatprep.subr.mxu0 0.0
        %280 = vmatpush1.msra.mxu0 0.0
        %281 = vmatprep.subr.mxu0 0.0
        %282 = vmatpush1.msra.mxu0 0.0
        %283 = vmatprep.subr.mxu0 0.0
        %284 = vmatpush1.msra.mxu0 0.0
        %285 = vmatprep.subr.mxu0 0.0
        %286 = vmatpush1.msra.mxu0 0.0
        %287 = vmatprep.subr.mxu0 0.0
        %288 = vmatpush1.msra.mxu0 0.0
        %289 = vmatprep.subr.mxu0 0.0
        %290 = vmatpush1.msra.mxu0 0.0
        %291 = vmatprep.subr.mxu0 0.0
        %292 = vmatpush1.msra.mxu0 0.0
        %293 = vmatprep.subr.mxu0 0.0
        %294 = vmatpush1.msra.mxu0 0.0
        %295 = vmatprep.subr.mxu0 0.0
        %296 = vmatpush1.msra.mxu0 0.0
        %297 = vmatprep.subr.mxu0 0.0
        %298 = vmatpush1.msra.mxu0 0.0
        %299 = vmatprep.mubr.f32.mxu0 0.0
        %300 = vmatmul.mubr.f32.gmra.mrb[0].mxu0 %v212
        %v301 = vpop.f32.mrb[0].mxu0
        %v302 = vadd.f32 0.0, %v301
        %v303 = vpop.f32.mrb[0].mxu0
        %v304 = vadd.f32 0.0, %v303
        %305 = vmatprep.mubr.f32.mxu0 0.0
        %306 = vmatmul.mubr.f32.gmra.mrb[0].mxu0 %v215
        %v307 = vpop.f32.mrb[0].mxu0
        %v308 = vadd.f32 0.0, %v307
        %v309 = vpop.f32.mrb[0].mxu0
        %v310 = vadd.f32 0.0, %v309
        %311 = vmatprep.mubr.f32.mxu0 0.0
        %312 = vmatmul.mubr.f32.gmra.mrb[0].mxu0 %v218
        %v313 = vpop.f32.mrb[0].mxu0
        %v314 = vadd.f32 0.0, %v313
        %v315 = vpop.f32.mrb[0].mxu0
        %v316 = vadd.f32 0.0, %v315
        %317 = vmatprep.mubr.f32.mxu0 0.0
        %318 = vmatmul.mubr.f32.gmra.mrb[0].mxu0 %v221
        %v319 = vpop.f32.mrb[0].mxu0
        %v320 = vadd.f32 0.0, %v319
        %v321 = vpop.f32.mrb[0].mxu0
        %v322 = vadd.f32 0.0, %v321
        %323 = vmatprep.mubr.f32.mxu0 0.0
        %324 = vmatmul.mubr.f32.gmra.mrb[0].mxu0 %v224
        %v325 = vpop.f32.mrb[0].mxu0
        %v326 = vadd.f32 0.0, %v325
        %v327 = vpop.f32.mrb[0].mxu0
        %v328 = vadd.f32 0.0, %v327
        %329 = vmatprep.mubr.f32.mxu0 0.0
        %330 = vmatmul.mubr.f32.gmra.mrb[0].mxu0 %v227
        %v331 = vpop.f32.mrb[0].mxu0
        %v332 = vadd.f32 0.0, %v331
        %v333 = vpop.f32.mrb[0].mxu0
        %v334 = vadd.f32 0.0, %v333
        %335 = vmatprep.mubr.f32.mxu0 0.0
        %336 = vmatmul.mubr.f32.gmra.mrb[0].mxu0 %v230
        %v337 = vpop.f32.mrb[0].mxu0
        %v338 = vadd.f32 0.0, %v337
        %v339 = vpop.f32.mrb[0].mxu0
        %v340 = vadd.f32 0.0, %v339
        %341 = vmatprep.mubr.f32.mxu0 0.0
        %342 = vmatmul.mubr.f32.gmra.mrb[0].mxu0 %v233
        %v343 = vpop.f32.mrb[0].mxu0
        %v344 = vadd.f32 0.0, %v343
        %v345 = vpop.f32.mrb[0].mxu0
        %v346 = vadd.f32 0.0, %v345
        %347 = vdwg.mxu0
        %v348 = vlaneseq
        %v349 = vand.u32 %v348, 127
        %v350 = vadd.s32 %v349, 128
        %vm351 = vcmp.eq.s32.totalorder %v349, 32
        %vm352 = vcmp.eq.s32.totalorder %v350, 32
        %vm353 = vcmp.eq.s32.totalorder %v349, 160
        %vm354 = vcmp.eq.s32.totalorder %v350, 160
        %vm355 = vmor %vm351, %vm353
        %vm356 = vmor %vm352, %vm354
        %v357 = vsel %vm355, 1.0, %v302
        %v358 = vsel %vm356, 1.0, %v304
        %v359 = vsel %vm355, 1.0, %v308
        %v360 = vsel %vm356, 1.0, %v310
        %v361 = vsel %vm355, 1.0, %v314
        %v362 = vsel %vm356, 1.0, %v316
        %v363 = vsel %vm355, 1.0, %v320
        %v364 = vsel %vm356, 1.0, %v322
        %v365 = vsel %vm355, 1.0, %v326
        %v366 = vsel %vm356, 1.0, %v328
        %v367 = vsel %vm355, 1.0, %v332
        %v368 = vsel %vm356, 1.0, %v334
        %v369 = vsel %vm355, 1.0, %v338
        %v370 = vsel %vm356, 1.0, %v340
        %v371 = vsel %vm355, 1.0, %v344
        %v372 = vsel %vm356, 1.0, %v346
        %373 = vst [vmem:[#allocation2] sm:$0xff] %v357
        %374 = vst [vmem:[#allocation2 + $0x8] sm:$0xff] %v358
        %375 = vst [vmem:[#allocation2 + $0x10] sm:$0xff] %v359
        %376 = vst [vmem:[#allocation2 + $0x18] sm:$0xff] %v360
        %377 = vst [vmem:[#allocation2 + $0x20] sm:$0xff] %v361
        %378 = vst [vmem:[#allocation2 + $0x28] sm:$0xff] %v362
        %379 = vst [vmem:[#allocation2 + $0x30] sm:$0xff] %v363
        %380 = vst [vmem:[#allocation2 + $0x38] sm:$0xff] %v364
        %381 = vst [vmem:[#allocation2 + $0x40] sm:$0xff] %v365
        %382 = vst [vmem:[#allocation2 + $0x48] sm:$0xff] %v366
        %383 = vst [vmem:[#allocation2 + $0x50] sm:$0xff] %v367
        %384 = vst [vmem:[#allocation2 + $0x58] sm:$0xff] %v368
        %385 = vst [vmem:[#allocation2 + $0x60] sm:$0xff] %v369
        %386 = vst [vmem:[#allocation2 + $0x68] sm:$0xff] %v370
        %387 = vst [vmem:[#allocation2 + $0x70] sm:$0xff] %v371
        %388 = vst [vmem:[#allocation2 + $0x78] sm:$0xff] %v372
        loop: start=0, step=1, limit=8
        $region33: #{tpu_custom_call.1} parent=31 // loop_pre_header
          _
        $region34: #{tpu_custom_call.1} parent=31 // loop_header
          %s390 = sphi 0, %s394
          %p391 = scmp.ge.s32.totalorder %s390, 8
        $region35: #{tpu_custom_call.1} parent=31 // loop_header_branch
          %393 = sbr.rel (%p391) target = $region39
        $region36: #{tpu_custom_call.1} parent=31 // loop_body
          %s395 = smul.u32 %s390, 8
          %s396 = sshra.s32 %s395, 3
          %s397 = sand.u32 %s395, 7
          %s398 = smul.u32 %s396, 2
          %s399 = smul.addr %s398, 8
          %s400 = scalar_lea.vmem [#allocation2], %s399
          %v401 = vld [vmem:[%s400] sm:$0xff]
          %v402 = vld [vmem:[%s400 + $0x8] sm:$0xff]
          %s403 = scalar_lea.vmem %s191, %s395
          %v404 = vld [vmem:[%s403] sm:$0xff]
          %vm405 = vcmask 64512
          %v407 = vsel %vm405, %v404, 0
          %409 = vmatprep.subr.mxu0 0.0
          %410 = vmatpush1.msra.mxu0 %v401
          %411 = vmatprep.subr.mxu0 0.0
          %412 = vmatpush1.msra.mxu0 0.0
          %413 = vmatprep.subr.mxu0 0.0
          %414 = vmatpush1.msra.mxu0 0.0
          %415 = vmatprep.subr.mxu0 0.0
          %416 = vmatpush1.msra.mxu0 0.0
          %417 = vmatprep.subr.mxu0 0.0
          %418 = vmatpush1.msra.mxu0 0.0
          %419 = vmatprep.subr.mxu0 0.0
          %420 = vmatpush1.msra.mxu0 0.0
          %421 = vmatprep.subr.mxu0 0.0
          %422 = vmatpush1.msra.mxu0 0.0
          %423 = vmatprep.subr.mxu0 0.0
          %424 = vmatpush1.msra.mxu0 0.0
          %425 = vmatprep.subr.mxu0 0.0
          %426 = vmatpush1.msra.mxu0 0.0
          %427 = vmatprep.subr.mxu0 0.0
          %428 = vmatpush1.msra.mxu0 0.0
          %429 = vmatprep.subr.mxu0 0.0
          %430 = vmatpush1.msra.mxu0 0.0
          %431 = vmatprep.subr.mxu0 0.0
          %432 = vmatpush1.msra.mxu0 0.0
          %433 = vmatprep.subr.mxu0 0.0
          %434 = vmatpush1.msra.mxu0 0.0
          %435 = vmatprep.subr.mxu0 0.0
          %436 = vmatpush1.msra.mxu0 0.0
          %437 = vmatprep.subr.mxu0 0.0
          %438 = vmatpush1.msra.mxu0 0.0
          %439 = vmatprep.subr.mxu0 0.0
          %440 = vmatpush1.msra.mxu0 0.0
          %441 = vmatprep.subr.mxu0 0.0
          %442 = vmatpush1.msra.mxu0 0.0
          %443 = vmatprep.subr.mxu0 0.0
          %444 = vmatpush1.msra.mxu0 0.0
          %445 = vmatprep.subr.mxu0 0.0
          %446 = vmatpush1.msra.mxu0 0.0
          %447 = vmatprep.subr.mxu0 0.0
          %448 = vmatpush1.msra.mxu0 0.0
          %449 = vmatprep.subr.mxu0 0.0
          %450 = vmatpush1.msra.mxu0 0.0
          %451 = vmatprep.subr.mxu0 0.0
          %452 = vmatpush1.msra.mxu0 0.0
          %453 = vmatprep.subr.mxu0 0.0
          %454 = vmatpush1.msra.mxu0 0.0
          %455 = vmatprep.subr.mxu0 0.0
          %456 = vmatpush1.msra.mxu0 0.0
          %457 = vmatprep.subr.mxu0 0.0
          %458 = vmatpush1.msra.mxu0 0.0
          %459 = vmatprep.subr.mxu0 0.0
          %460 = vmatpush1.msra.mxu0 0.0
          %461 = vmatprep.subr.mxu0 0.0
          %462 = vmatpush1.msra.mxu0 0.0
          %463 = vmatprep.subr.mxu0 0.0
          %464 = vmatpush1.msra.mxu0 0.0
          %465 = vmatprep.subr.mxu0 0.0
          %466 = vmatpush1.msra.mxu0 0.0
          %467 = vmatprep.subr.mxu0 0.0
          %468 = vmatpush1.msra.mxu0 0.0
          %469 = vmatprep.subr.mxu0 0.0
          %470 = vmatpush1.msra.mxu0 0.0
          %471 = vmatprep.subr.mxu0 0.0
          %472 = vmatpush1.msra.mxu0 0.0
          %473 = vmatprep.mubr.f32.mxu0 0.0
          %474 = vmatmul.mubr.f32.gmra.mrb[0].mxu0 %v407
          %v475 = vpop.f32.mrb[0].mxu0
          %v476 = vadd.f32 0.0, %v475
          %v477 = vpop.f32.mrb[0].mxu0
          %478 = vdwg.mxu0
          %479 = vxpose.xlu0.b32.start [1/16] %v404, 128
          %480 = vxpose.xlu0.b32.cont [2/16] 0.0, 128
          %481 = vxpose.xlu0.b32.cont [3/16] 0.0, 128
          %482 = vxpose.xlu0.b32.cont [4/16] 0.0, 128
          %483 = vxpose.xlu0.b32.cont [5/16] 0.0, 128
          %484 = vxpose.xlu0.b32.cont [6/16] 0.0, 128
          %485 = vxpose.xlu0.b32.cont [7/16] 0.0, 128
          %486 = vxpose.xlu0.b32.cont [8/16] 0.0, 128
          %487 = vxpose.xlu0.b32.cont [9/16] 0.0, 128
          %488 = vxpose.xlu0.b32.cont [10/16] 0.0, 128
          %489 = vxpose.xlu0.b32.cont [11/16] 0.0, 128
          %490 = vxpose.xlu0.b32.cont [12/16] 0.0, 128
          %491 = vxpose.xlu0.b32.cont [13/16] 0.0, 128
          %492 = vxpose.xlu0.b32.cont [14/16] 0.0, 128
          %493 = vxpose.xlu0.b32.cont [15/16] 0.0, 128
          %494 = vxpose.xlu0.b32.end [16/16] 0.0, 128
          %v495 = vpop.trf.xlu0
          %v496 = vpop.trf.xlu0
          %v497 = vpop.trf.xlu0
          %v498 = vpop.trf.xlu0
          %v499 = vpop.trf.xlu0
          %v500 = vpop.trf.xlu0
          %v501 = vpop.trf.xlu0
          %v502 = vpop.trf.xlu0
          %v503 = vpop.trf.xlu0
          %v504 = vpop.trf.xlu0
          %v505 = vpop.trf.xlu0
          %v506 = vpop.trf.xlu0
          %v507 = vpop.trf.xlu0
          %v508 = vpop.trf.xlu0
          %v509 = vpop.trf.xlu0
          %v510 = vpop.trf.xlu0
          %v512 = vsel %vm405, %v495, 0
          %514 = vmatprep.subr.mxu0 0.0
          %515 = vmatpush1.msra.mxu0 %v402
          %516 = vmatprep.subr.mxu0 0.0
          %517 = vmatpush1.msra.mxu0 0.0
          %518 = vmatprep.subr.mxu0 0.0
          %519 = vmatpush1.msra.mxu0 0.0
          %520 = vmatprep.subr.mxu0 0.0
          %521 = vmatpush1.msra.mxu0 0.0
          %522 = vmatprep.subr.mxu0 0.0
          %523 = vmatpush1.msra.mxu0 0.0
          %524 = vmatprep.subr.mxu0 0.0
          %525 = vmatpush1.msra.mxu0 0.0
          %526 = vmatprep.subr.mxu0 0.0
          %527 = vmatpush1.msra.mxu0 0.0
          %528 = vmatprep.subr.mxu0 0.0
          %529 = vmatpush1.msra.mxu0 0.0
          %530 = vmatprep.subr.mxu0 0.0
          %531 = vmatpush1.msra.mxu0 0.0
          %532 = vmatprep.subr.mxu0 0.0
          %533 = vmatpush1.msra.mxu0 0.0
          %534 = vmatprep.subr.mxu0 0.0
          %535 = vmatpush1.msra.mxu0 0.0
          %536 = vmatprep.subr.mxu0 0.0
          %537 = vmatpush1.msra.mxu0 0.0
          %538 = vmatprep.subr.mxu0 0.0
          %539 = vmatpush1.msra.mxu0 0.0
          %540 = vmatprep.subr.mxu0 0.0
          %541 = vmatpush1.msra.mxu0 0.0
          %542 = vmatprep.subr.mxu0 0.0
          %543 = vmatpush1.msra.mxu0 0.0
          %544 = vmatprep.subr.mxu0 0.0
          %545 = vmatpush1.msra.mxu0 0.0
          %546 = vmatprep.subr.mxu0 0.0
          %547 = vmatpush1.msra.mxu0 0.0
          %548 = vmatprep.subr.mxu0 0.0
          %549 = vmatpush1.msra.mxu0 0.0
          %550 = vmatprep.subr.mxu0 0.0
          %551 = vmatpush1.msra.mxu0 0.0
          %552 = vmatprep.subr.mxu0 0.0
          %553 = vmatpush1.msra.mxu0 0.0
          %554 = vmatprep.subr.mxu0 0.0
          %555 = vmatpush1.msra.mxu0 0.0
          %556 = vmatprep.subr.mxu0 0.0
          %557 = vmatpush1.msra.mxu0 0.0
          %558 = vmatprep.subr.mxu0 0.0
          %559 = vmatpush1.msra.mxu0 0.0
          %560 = vmatprep.subr.mxu0 0.0
          %561 = vmatpush1.msra.mxu0 0.0
          %562 = vmatprep.subr.mxu0 0.0
          %563 = vmatpush1.msra.mxu0 0.0
          %564 = vmatprep.subr.mxu0 0.0
          %565 = vmatpush1.msra.mxu0 0.0
          %566 = vmatprep.subr.mxu0 0.0
          %567 = vmatpush1.msra.mxu0 0.0
          %568 = vmatprep.subr.mxu0 0.0
          %569 = vmatpush1.msra.mxu0 0.0
          %570 = vmatprep.subr.mxu0 0.0
          %571 = vmatpush1.msra.mxu0 0.0
          %572 = vmatprep.subr.mxu0 0.0
          %573 = vmatpush1.msra.mxu0 0.0
          %574 = vmatprep.subr.mxu0 0.0
          %575 = vmatpush1.msra.mxu0 0.0
          %576 = vmatprep.subr.mxu0 0.0
          %577 = vmatpush1.msra.mxu0 0.0
          %578 = vmatprep.mubr.f32.mxu0 0.0
          %579 = vmatmul.mubr.f32.gmra.mrb[0].mxu0 %v512
          %v580 = vpop.f32.mrb[0].mxu0
          %v581 = vadd.f32 0.0, %v580
          %v582 = vpop.f32.mrb[0].mxu0
          %583 = vdwg.mxu0
          %v584 = vrcp.pop %v476
          %v585 = vmul.f32 %v584, 0.5
          %v586 = vrcp.pop %v581
          %v587 = vmul.f32 %v586, 0.5
          %589 = vset.pattern.permute.xlu0 32
          %590 = vperm.xlu0 %589, %v585
          %v591 = vpop.permute.xlu0 %590
          %v593 = vmul.f32 %v476, %v591
          %v594 = vmax.f32 %v593, 0.0
          %596 = vset.pattern.permute.xlu0 32
          %597 = vperm.xlu0 %596, %v587
          %v598 = vpop.permute.xlu0 %597
          %v600 = vmul.f32 %v581, %v598
          %v601 = vmax.f32 %v600, 0.0
          %v602 = vadd.f32 %v594, %v601
          %s603 = scalar_lea.vmem %s180, %s395 [#allocation3]
          %604 = vst [vmem:[%s603] sm:$0xff] %v602
        $region37: #{tpu_custom_call.1} parent=31 // loop_footer
          %s394 = sadd.s32 1, %s390
        $region38: #{tpu_custom_call.1} parent=31 // loop_footer_branch
          %389 = sbr.rel target = $region34
        $region39: #{tpu_custom_call.1} parent=31 // loop_exit
          _
        %s605 = sand.u32 %s98, 1
        %s606 = scalar_lea.sflag [#allocation4], %s605
        %s607 = sand.u32 %s98, 1
        %s608 = smul.addr %s607, 64
        %s609 = scalar_lea.vmem [#allocation3], %s608
        // Predicated region
        $region40: #{tpu_custom_call.1} parent=31 // pred_check
          %p610 = pneg %p108
        $region41: #{tpu_custom_call.1} parent=31 // pred_check_branch
          %612 = sbr.rel (%p610) target = $region43
        $region42: #{tpu_custom_call.1} parent=31 // pred_region
          %s613 = smul.u32 8, %s17
          %s615 = ssub.s32 1024, 1024
          %616 = vsyncadd %s606, %s615
          %s617 = smul.addr %s613, 128
          %s618 = scalar_lea.hbm %s3, %s617
          %s619 = sshll.u32 %s609, 4
          %s620 = int_to_ptr.vmem [resolvable:$true] %s619
          %625 = dma.vmem_to_hbm [thread:$0]  %s620, 1024, %s618, %s606, 128, 128, 8
        $region43: #{tpu_custom_call.1} parent=31 // pred_fallthru
          _
      $region32: #{tpu_custom_call.1} parent=5 // pred_fallthru
        _
      %p626 = scmp.le.s32.totalorder 2, %s12
      // Predicated region
      $region44: #{tpu_custom_call.1} parent=5 // pred_check
        %p627 = pneg %p626
      $region45: #{tpu_custom_call.1} parent=5 // pred_check_branch
        %629 = sbr.rel (%p627) target = $region47
      $region46: #{tpu_custom_call.1} parent=5 // pred_region
        %s630 = ssub.s32 %s12, 2
        // Predicated region
        $region48: #{tpu_custom_call.1} parent=46 // pred_check
          %p631 = pneg %p114
        $region49: #{tpu_custom_call.1} parent=46 // pred_check_branch
          %633 = sbr.rel (%p631) target = $region51
        $region50: #{tpu_custom_call.1} parent=46 // pred_region
          %s634 = sand.u32 %s99, 1
          %s635 = scalar_lea.sflag [#allocation4], %s634
          %s636 = sand.u32 %s99, 1
          %s637 = smul.addr %s636, 64
          %s638 = scalar_lea.vmem [#allocation3], %s637
          %639 = dma.done %s635, 1024
        $region51: #{tpu_custom_call.1} parent=46 // pred_fallthru
          _
      $region47: #{tpu_custom_call.1} parent=5 // pred_fallthru
        _
    $region6: #{tpu_custom_call.1} parent=1 // loop_footer
      %s16 = sadd.s32 1, %s12
    $region7: #{tpu_custom_call.1} parent=1 // loop_footer_branch
      %11 = sbr.rel target = $region3
    $region8: #{tpu_custom_call.1} parent=1 // loop_exit
      _
    %640 = vsyncpa [#allocation4], 1
    %s641 = scalar_lea.sflag [#allocation4], 1
    %642 = vsyncpa %s641, 1

</llo_original>
